<compile_context>
chip_gen: v6e
topology: v6e:2x2x1
jax: 0.10.0
libtpu: 0.0.40
codegen_flags: <defaults>
</compile_context>

<pallas_src>
import jax
import jax.numpy as jnp
from jax.experimental import pallas as pl
from jax.experimental.pallas import tpu as pltpu


def _round_up(x, m):
    return ((x + m - 1) // m) * m


# ----------------------------- Pallas kernel ------------------------------- #
def _patch_embed_kernel(x_ref, w_ref, b_ref, o_ref):
    # x_ref: (TILE_M, K)  bf16 patch rows
    # w_ref: (K, E)       bf16 projection weight (VMEM-resident, constant idx)
    # b_ref: (1, E)       f32 bias (VMEM-resident, constant idx)
    # o_ref: (TILE_M, E)
    acc = jnp.dot(x_ref[...], w_ref[...], preferred_element_type=jnp.float32)
    o_ref[...] = (acc + b_ref[...]).astype(o_ref.dtype)


def _projection(patches, weight_t, bias_f32, *, out_dtype, tile_m=512):
    """patches: (M, K), weight_t: (K, E), bias_f32: (E,) f32 -> (M, E)."""
    M, K = patches.shape
    E = weight_t.shape[1]

    # Effective M tile: multiple of 8, no larger than needed.
    tm = min(tile_m, _round_up(M, 8))
    tm = _round_up(tm, 8)
    M_pad = _round_up(M, tm)
    if M_pad != M:
        patches = jnp.pad(patches, ((0, M_pad - M), (0, 0)))

    grid = (M_pad // tm,)
    bias2d = bias_f32.reshape(1, E)

    bytes_accessed = (
        M_pad * K * patches.dtype.itemsize
        + K * E * weight_t.dtype.itemsize
        + E * bias2d.dtype.itemsize
        + M_pad * E * jnp.dtype(out_dtype).itemsize
    )

    out = pl.pallas_call(
        _patch_embed_kernel,
        out_shape=jax.ShapeDtypeStruct((M_pad, E), out_dtype),
        grid_spec=pltpu.PrefetchScalarGridSpec(
            num_scalar_prefetch=0,
            grid=grid,
            in_specs=[
                pl.BlockSpec((tm, K), lambda i: (i, 0)),   # streamed patch tiles
                pl.BlockSpec((K, E), lambda i: (0, 0)),    # resident weight
                pl.BlockSpec((1, E), lambda i: (0, 0)),    # resident bias (f32)
            ],
            out_specs=pl.BlockSpec((tm, E), lambda i: (i, 0)),
        ),
        compiler_params=pltpu.CompilerParams(
            dimension_semantics=("parallel",),
        ),
        cost_estimate=pl.CostEstimate(
            flops=2 * M_pad * K * E,
            transcendentals=0,
            bytes_accessed=bytes_accessed,
        ),
    )(patches, weight_t, bias2d)

    return out[:M] if M_pad != M else out


# ----------------------------- Module wrapper ------------------------------ #
class PatchEmbed:
    """Image to Patch Embedding (Pallas/TPU).

    Equivalent to:
        x = Conv2d(in_chans, embed_dim, kernel_size=patch, stride=patch)(x)
        x = x.flatten(2).transpose(1, 2)
    """

    def __init__(self, img_size=224, patch_size=16, in_chans=3, embed_dim=768,
                 key=jax.random.PRNGKey(0), dtype=jnp.float32,
                 compute_dtype=jnp.bfloat16, out_dtype=None, tile_m=512):
        img_size = (img_size, img_size) if isinstance(img_size, int) else tuple(img_size)
        patch_size = (patch_size, patch_size) if isinstance(patch_size, int) else tuple(patch_size)
        self.img_size = img_size
        self.patch_size = patch_size
        self.patches_layout = (1, img_size[0] // patch_size[0], img_size[1] // patch_size[1])
        self.num_patches = int(self.patches_layout[1] * self.patches_layout[2])
        self.in_chans = in_chans
        self.embed_dim = embed_dim
        self.compute_dtype = compute_dtype
        self.out_dtype = dtype if out_dtype is None else out_dtype
        self.tile_m = tile_m

        # Deterministic parameter init (mimics Conv2d default scale, synthetic values).
        kw, kb = jax.random.split(key)
        fan_in = in_chans * patch_size[0] * patch_size[1]
        bound = 1.0 / (fan_in ** 0.5)
        # conv weight: (embed_dim, in_chans, pH, pW), like nn.Conv2d.weight
        self.weight = jax.random.uniform(
            kw, (embed_dim, in_chans, patch_size[0], patch_size[1]),
            minval=-bound, maxval=bound, dtype=dtype)
        self.bias = jax.random.uniform(
            kb, (embed_dim,), minval=-bound, maxval=bound, dtype=dtype)

        # Pre-laid-out / pre-cast params: (E, C, pH, pW) -> (K, E) in bf16,
        # bias once in f32 (no per-grid-step cast inside the kernel).
        self.weight_t = self.weight.reshape(embed_dim, fan_in).T.astype(compute_dtype)
        self.bias_f32 = self.bias.astype(jnp.float32)

    def __call__(self, x):
        # x: (B, C, H, W)  — NCHW, same as the PyTorch module.
        B, C, H, W = x.shape
        pH, pW = self.patch_size
        nH, nW = H // pH, W // pW
        assert (C, H, W) == (self.in_chans, self.img_size[0], self.img_size[1])

        # --- glue: extract non-overlapping patches (pure layout work) ---
        # Done in bf16 so the HBM relayout moves half the bytes.
        # (B, C, nH, pH, nW, pW) -> (B, nH, nW, C, pH, pW) -> (B*nH*nW, C*pH*pW)
        xc = x.astype(self.compute_dtype)
        patches = xc.reshape(B, C, nH, pH, nW, pW)
        patches = jnp.transpose(patches, (0, 2, 4, 1, 3, 5))
        patches = patches.reshape(B * nH * nW, C * pH * pW)

        # --- hot path in Pallas: M-tiled matmul + bias (bf16 in, f32 acc) ---
        out = _projection(patches, self.weight_t, self.bias_f32,
                          out_dtype=self.out_dtype, tile_m=self.tile_m)

        # (B*nH*nW, E) -> (B, num_patches, E), patch order row-major over (nH, nW),
        # identical to conv.flatten(2).transpose(1, 2).
        return out.reshape(B, nH * nW, self.embed_dim)


# --------------------------------- main ------------------------------------ #
if __name__ == "__main__":
    key = jax.random.PRNGKey(0)
    k_in, k_param = jax.random.split(key)

    # Small shapes consistent with the module's forward:
    # batch=2, in_chans=4, img_size=16, patch_size=4, embed_dim=32
    B, C, H, W = 2, 4, 16, 16
    patch = 4
    embed_dim = 32

    x = jax.random.normal(k_in, (B, C, H, W), dtype=jnp.float32)

    mod = PatchEmbed(img_size=H, patch_size=patch, in_chans=C,
                     embed_dim=embed_dim, key=k_param)

    out = mod(x)
    out = jax.block_until_ready(out)

    # Reference: same numerics (bf16 operands, f32 accumulation) via lax.conv.
    ref = jax.lax.conv_general_dilated(
        x.astype(jnp.bfloat16), mod.weight.astype(jnp.bfloat16),
        window_strides=(patch, patch), padding="VALID",
        dimension_numbers=("NCHW", "OIHW", "NCHW"),
        preferred_element_type=jnp.float32)
    ref = ref + mod.bias_f32.reshape(1, embed_dim, 1, 1)
    ref = ref.reshape(B, embed_dim, -1).transpose(0, 2, 1)

    assert out.shape == (B, mod.num_patches, embed_dim), out.shape
    assert jnp.allclose(out.astype(jnp.float32), ref, atol=1e-2, rtol=1e-2), (
        float(jnp.max(jnp.abs(out.astype(jnp.float32) - ref))))

    print("KERNEL_OK")
</pallas_src>

<mosaic_0001>
module attributes {stable_mosaic.version = 11 : i64} {
  func.func @_patch_embed_kernel(%arg0: i32, %arg1: memref<32x64xbf16, #tpu.memory_space<vmem>>, %arg2: memref<64x32xbf16, #tpu.memory_space<vmem>>, %arg3: memref<1x32xf32, #tpu.memory_space<vmem>>, %arg4: memref<32x32xf32, #tpu.memory_space<vmem>>) attributes {dimension_semantics = [#tpu.dimension_semantics<parallel>], iteration_bounds = array<i64: 1>, scalar_prefetch = 0 : i64, scratch_operands = 0 : i64, tpu.core_type = #tpu.core_type<tc>, window_params = [{transform_indices = @transform_0, window_bounds = array<i64: 32, 64>}, {pipeline_mode = #tpu.pipeline_mode<synchronous>, transform_indices = @transform_1, window_bounds = array<i64: 64, 32>}, {pipeline_mode = #tpu.pipeline_mode<synchronous>, transform_indices = @transform_2, window_bounds = array<i64: 1, 32>}, {transform_indices = @transform_3, window_bounds = array<i64: 32, 32>}]} {
    %c0 = arith.constant 0 : index
    %c0_0 = arith.constant 0 : index
    %0 = vector.load %arg1[%c0, %c0_0] : memref<32x64xbf16, #tpu.memory_space<vmem>>, vector<32x64xbf16>
    %c0_1 = arith.constant 0 : index
    %c0_2 = arith.constant 0 : index
    %1 = vector.load %arg2[%c0_1, %c0_2] : memref<64x32xbf16, #tpu.memory_space<vmem>>, vector<64x32xbf16>
    %cst = arith.constant dense<0.000000e+00> : vector<32x32xf32>
    %2 = tpu.matmul %0, %1, %cst {dimension_numbers = #tpu.dot_dimension_numbers<[1], [0], [0], [1], [0, 0, 1, 1], [], []>} : vector<32x64xbf16>, vector<64x32xbf16>, vector<32x32xf32> -> vector<32x32xf32>
    %c0_3 = arith.constant 0 : index
    %c0_4 = arith.constant 0 : index
    %3 = vector.load %arg3[%c0_3, %c0_4] : memref<1x32xf32, #tpu.memory_space<vmem>>, vector<1x32xf32>
    %4 = vector.broadcast %3 : vector<1x32xf32> to vector<32x32xf32>
    %5 = arith.addf %2, %4 : vector<32x32xf32>
    %c0_5 = arith.constant 0 : index
    %c0_6 = arith.constant 0 : index
    %6 = vector.load %arg4[%c0_5, %c0_6] : memref<32x32xf32, #tpu.memory_space<vmem>>, vector<32x32xf32>
    tpu.vector_store %arg4[%c0_5, %c0_6], %5 {strides = array<i32>} : memref<32x32xf32, #tpu.memory_space<vmem>>, vector<32x32xf32>,
    return
  }
  func.func @transform_0(%arg0: i32) -> (i32, i32) {
    %c0_i32 = arith.constant 0 : i32
    %c0_i32_0 = arith.constant 0 : i32
    return %arg0, %c0_i32 : i32, i32
  }
  func.func @transform_1(%arg0: i32) -> (i32, i32) {
    %c0_i32 = arith.constant 0 : i32
    %c0_i32_0 = arith.constant 0 : i32
    %c0_i32_1 = arith.constant 0 : i32
    return %c0_i32, %c0_i32_0 : i32, i32
  }
  func.func @transform_2(%arg0: i32) -> (i32, i32) {
    %c0_i32 = arith.constant 0 : i32
    %c0_i32_0 = arith.constant 0 : i32
    %c0_i32_1 = arith.constant 0 : i32
    return %c0_i32, %c0_i32_0 : i32, i32
  }
  func.func @transform_3(%arg0: i32) -> (i32, i32) {
    %c0_i32 = arith.constant 0 : i32
    %c0_i32_0 = arith.constant 0 : i32
    return %arg0, %c0_i32 : i32, i32
  }
}

</mosaic_0001>

<llo_original>
// kernel: tpu_custom_call.1
$region0: #{tpu_custom_call.1}
  #allocation0 [shape = 'u32[]', space=smem, size = 0x4, offset = 0x4, fixed_abs, tag = 'smem constant byte address 0x4 - core index']
  #allocation1 [shape = 'u32[144,128]{1,0:T(1,128)}', space=vmem, size = 0x12000, scoped, tag = 'internal scratch']
  %s0 = inlined_call_operand.vmem [shape: bf16[32,64], index: 0, kind: input, shape index: {}]
  %s1 = inlined_call_operand.vmem [shape: bf16[64,32], index: 1, kind: input, shape index: {}]
  %s2 = inlined_call_operand.vmem [shape: f32[1,32], index: 2, kind: input, shape index: {}]
  %s3 = inlined_call_operand.hbm [shape: f32[32,32], index: 3, kind: output, shape index: {}]
  %s4 = sld [smem:[#allocation0]]
  $region22: #{tpu_custom_call.1} parent=0
    _
  %s6 = ssub.s32 1, %s4
  %s7 = scalar_select 0, %s6, %s4
  $region1: #{tpu_custom_call.1} parent=0
    #allocation2 [shape = 'u8[16384]{0}', space=vmem, size = 0x4000, scoped, tag = 'output window, operand 0, single buffered']
    #allocation3 [shape = 's32[1]{0}', space=sflag, size = 0x4, scoped, tag = 'scoped memory for tpu_custom_call.1']
    %8 = vsyncpa [#allocation3], 0
    // Predicated region
    $region2: #{tpu_custom_call.1} parent=1 // pred_check
      _
    $region3: #{tpu_custom_call.1} parent=1 // pred_check_branch
      %10 = sbr.rel (0) target = $region5
    $region4: #{tpu_custom_call.1} parent=1 // pred_region
      _
    $region5: #{tpu_custom_call.1} parent=1 // pred_fallthru
      _
    // Predicated region
    $region6: #{tpu_custom_call.1} parent=1 // pred_check
      _
    $region7: #{tpu_custom_call.1} parent=1 // pred_check_branch
      %12 = sbr.rel (0) target = $region9
    $region8: #{tpu_custom_call.1} parent=1 // pred_region
      _
    $region9: #{tpu_custom_call.1} parent=1 // pred_fallthru
      _
    // Predicated region
    $region10: #{tpu_custom_call.1} parent=1 // pred_check
      _
    $region11: #{tpu_custom_call.1} parent=1 // pred_check_branch
      %14 = sbr.rel (0) target = $region13
    $region12: #{tpu_custom_call.1} parent=1 // pred_region
      _
    $region13: #{tpu_custom_call.1} parent=1 // pred_fallthru
      _
    %v16 = vld [vmem:[%s0] sm:$0xf]
    %v17 = vld [vmem:[%s0 + $0x4] sm:$0xf]
    %v18 = vld [vmem:[%s0 + $0x8] sm:$0xf]
    %v19 = vld [vmem:[%s0 + $0xc] sm:$0xf]
    %v20 = vld [vmem:[%s1] sm:$0xf]
    %v21 = vld [vmem:[%s1 + $0x4] sm:$0xf]
    %v22 = vld [vmem:[%s1 + $0x8] sm:$0xf]
    %v23 = vld [vmem:[%s1 + $0xc] sm:$0xf]
    %v24 = vld [vmem:[%s1 + $0x10] sm:$0xf]
    %v25 = vld [vmem:[%s1 + $0x14] sm:$0xf]
    %v26 = vld [vmem:[%s1 + $0x18] sm:$0xf]
    %v27 = vld [vmem:[%s1 + $0x1c] sm:$0xf]
    %v28 = vld [vmem:[%s2] sm:$0x1]
    %v30 = vlaneseq
    %v31 = vshrl.u32 %v30, 7
    %v32 = vsub.s32 0, %v31
    %v33 = vrot.slane %v28, %v32
    %v39 = vunpack.c.l.b16 %v16
    %v40 = vunpack.c.l.b16 %v17
    %v41 = vunpack.c.l.b16 %v18
    %v42 = vunpack.c.l.b16 %v19
    %v43 = vpack.c.b16 %v40, %v39
    %v44 = vpack.c.b16 %v42, %v41
    %v53 = vunpack.c.l.b16 %v20
    %v54 = vunpack.c.l.b16 %v21
    %v55 = vunpack.c.l.b16 %v22
    %v56 = vunpack.c.l.b16 %v23
    %v57 = vunpack.c.l.b16 %v24
    %v58 = vunpack.c.l.b16 %v25
    %v59 = vunpack.c.l.b16 %v26
    %v60 = vunpack.c.l.b16 %v27
    %v61 = vpack.c.b16 %v54, %v53
    %v62 = vpack.c.b16 %v56, %v55
    %v63 = vpack.c.b16 %v58, %v57
    %v64 = vpack.c.b16 %v60, %v59
    %vm69 = vcmask 523264
    %v71 = vsel %vm69, %v43, 0
    %v74 = vsel %vm69, %v44, 0
    %76 = vmatprep.subr.bf16.mxu0 0
    %77 = vmatpush1.bf16.msra.mxu0 0
    %78 = vmatprep.subr.bf16.mxu0 0
    %79 = vmatpush1.bf16.msra.mxu0 0
    %80 = vmatprep.subr.bf16.mxu0 0
    %81 = vmatpush1.bf16.msra.mxu0 0
    %82 = vmatprep.subr.bf16.mxu0 0
    %83 = vmatpush1.bf16.msra.mxu0 0
    %84 = vmatprep.subr.bf16.mxu0 0
    %85 = vmatpush1.bf16.msra.mxu0 %v64
    %86 = vmatprep.subr.bf16.mxu0 0
    %87 = vmatpush1.bf16.msra.mxu0 %v63
    %88 = vmatprep.subr.bf16.mxu0 0
    %89 = vmatpush1.bf16.msra.mxu0 %v62
    %90 = vmatprep.subr.bf16.mxu0 0
    %91 = vmatpush1.bf16.msra.mxu0 %v61
    %92 = vmatprep.subr.bf16.mxu0 0
    %93 = vmatpush2.bf16.msra.mxu0 0
    %94 = vmatprep.subr.bf16.mxu0 0
    %95 = vmatpush2.bf16.msra.mxu0 0
    %96 = vmatprep.subr.bf16.mxu0 0
    %97 = vmatpush2.bf16.msra.mxu0 0
    %98 = vmatprep.subr.bf16.mxu0 0
    %99 = vmatpush2.bf16.msra.mxu0 0
    %100 = vmatprep.subr.bf16.mxu0 0
    %101 = vmatpush2.bf16.msra.mxu0 0
    %102 = vmatprep.subr.bf16.mxu0 0
    %103 = vmatpush2.bf16.msra.mxu0 0
    %104 = vmatprep.subr.bf16.mxu0 0
    %105 = vmatpush2.bf16.msra.mxu0 0
    %106 = vmatprep.subr.bf16.mxu0 0
    %107 = vmatpush2.bf16.msra.mxu0 0
    %108 = vmatprep.mubr.bf16.mxu0 0
    %109 = vmatmul.mubr.bf16.gmra.mxu0 %v71
    %v110 = vpop.f32.mrf.mxu0
    %v111 = vadd.f32 %v33, %v110
    %v112 = vpop.f32.mrf.mxu0
    %v113 = vpop.f32.mrf.mxu0
    %v114 = vadd.f32 %v33, %v113
    %v115 = vpop.f32.mrf.mxu0
    %116 = vmatprep.mubr.bf16.mxu0 0
    %117 = vmatmul.mubr.bf16.gmra.mxu0 %v74
    %v118 = vpop.f32.mrf.mxu0
    %v119 = vadd.f32 %v33, %v118
    %v120 = vpop.f32.mrf.mxu0
    %v121 = vpop.f32.mrf.mxu0
    %v122 = vadd.f32 %v33, %v121
    %v123 = vpop.f32.mrf.mxu0
    %124 = vdwg.mxu0
    %vm125 = vcmask 261120
    %126 = vst.msk [vmem:[#allocation2] sm:$0xff] %vm125, %v111
    %127 = vst.msk [vmem:[#allocation2 + $0x8] sm:$0xff] %vm125, %v114
    %128 = vst.msk [vmem:[#allocation2 + $0x10] sm:$0xff] %vm125, %v119
    %129 = vst.msk [vmem:[#allocation2 + $0x18] sm:$0xff] %vm125, %v122
    // Predicated region
    $region14: #{tpu_custom_call.1} parent=1 // pred_check
      _
    $region15: #{tpu_custom_call.1} parent=1 // pred_check_branch
      %131 = sbr.rel (0) target = $region17
    $region16: #{tpu_custom_call.1} parent=1 // pred_region
      %s133 = ssub.s32 512, 512
      %134 = vsyncadd [#allocation3], %s133
      %s135 = sshll.u32 [#allocation2], 4
      %s136 = int_to_ptr.vmem [resolvable:$true] %s135
      %141 = dma.vmem_to_hbm [thread:$0]  %s136, 512, %s3, [#allocation3], 128, 128, 8
    $region17: #{tpu_custom_call.1} parent=1 // pred_fallthru
      _
    // Predicated region
    $region18: #{tpu_custom_call.1} parent=1 // pred_check
      _
    $region19: #{tpu_custom_call.1} parent=1 // pred_check_branch
      %143 = sbr.rel (0) target = $region21
    $region20: #{tpu_custom_call.1} parent=1 // pred_region
      %144 = dma.done [#allocation3], 512
    $region21: #{tpu_custom_call.1} parent=1 // pred_fallthru
      _
    %145 = vsyncpa [#allocation3], 1

</llo_original>
